<compile_context>
chip_gen: v7x
topology: tpu7x:2x2x1
jax: 0.10.0
libtpu: 0.0.40
codegen_flags: <defaults>
</compile_context>

<pallas_src>
import functools

import jax
import jax.numpy as jnp
from jax.experimental import pallas as pl
from jax.experimental.pallas import tpu as pltpu

SMOOTH = 1.0
P_EXP = 2  # denominator exponent

_LANES = 512          # lane-dim width (multiple of 128)
_SUB = 8              # sublane quantum
_MAX_BLOCK_ROWS = 2048  # (2048, 512) f32 = 4 MiB per input block


def _dice_partial_kernel(p_ref, t_ref, out_ref, *, p_exp):
    """Accumulate vector partial sums for one (block_rows, LANES) tile.

    out_ref block: (1, 2, 8, LANES) f32, resident across the inner grid axis.
      [0, 0] : running elementwise partial of predict * target
      [0, 1] : running elementwise partial of predict^p + target^p
    """
    k = pl.program_id(1)

    @pl.when(k == 0)
    def _init():
        out_ref[...] = jnp.zeros_like(out_ref)

    pr = p_ref[...].astype(jnp.float32)
    tg = t_ref[...].astype(jnp.float32)

    prod = pr * tg
    if p_exp == 2:
        pw = jnp.square(pr) + jnp.square(tg)          # VPU multiplies only
    elif p_exp == 1:
        pw = pr + tg
    else:
        pw = pr ** p_exp + tg ** p_exp                # general fallback

    rows, lanes = prod.shape
    g = rows // _SUB
    if g == 1:
        num_part = prod
        den_part = pw
    else:
        # Fold row-groups onto an (8, LANES) partial: vreg-aligned reshape +
        # leading-axis sum == pure elementwise vector adds (no XLU, no scalar).
        num_part = jnp.sum(prod.reshape(g, _SUB, lanes), axis=0)
        den_part = jnp.sum(pw.reshape(g, _SUB, lanes), axis=0)

    out_ref[0, 0, :, :] = out_ref[0, 0, :, :] + num_part
    out_ref[0, 1, :, :] = out_ref[0, 1, :, :] + den_part


def binary_dice_loss(predict, target, smooth=SMOOTH, p_exp=P_EXP):
    assert predict.shape[0] == target.shape[0], "predict & target batch size don't match"

    pred_flat = predict.reshape(-1)
    targ_flat = target.reshape(-1)
    n_elem = pred_flat.shape[0]

    # Dense (rows, LANES) layout, rows a multiple of 8.
    rows = pl.cdiv(n_elem, _LANES)
    rows = pl.cdiv(rows, _SUB) * _SUB

    if rows <= _MAX_BLOCK_ROWS:
        # Tiny/medium case: one block, one grid step, no accumulator carry.
        block_rows, n_par, n_k = rows, 1, 1
    else:
        block_rows = _MAX_BLOCK_ROWS
        n_blocks = pl.cdiv(rows, block_rows)
        n_par = 2 if n_blocks >= 2 else 1   # split across TCs on v7x
        n_k = pl.cdiv(n_blocks, n_par)

    total_rows = n_par * n_k * block_rows
    pad = total_rows * _LANES - n_elem
    if pad:
        pred_flat = jnp.pad(pred_flat, (0, pad))  # zeros are neutral for dice sums
        targ_flat = jnp.pad(targ_flat, (0, pad))

    pred2d = pred_flat.reshape(total_rows, _LANES)
    targ2d = targ_flat.reshape(total_rows, _LANES)

    kernel = functools.partial(_dice_partial_kernel, p_exp=p_exp)

    partials = pl.pallas_call(
        kernel,
        out_shape=jax.ShapeDtypeStruct((n_par, 2, _SUB, _LANES), jnp.float32),
        grid=(n_par, n_k),
        in_specs=[
            pl.BlockSpec((block_rows, _LANES), lambda p, k: (p * n_k + k, 0)),
            pl.BlockSpec((block_rows, _LANES), lambda p, k: (p * n_k + k, 0)),
        ],
        out_specs=pl.BlockSpec((1, 2, _SUB, _LANES), lambda p, k: (p, 0, 0, 0)),
        compiler_params=pltpu.CompilerParams(
            dimension_semantics=("parallel", "arbitrary"),
            vmem_limit_bytes=32 * 1024 * 1024,
        ),
    )(pred2d, targ2d)

    # Tiny epilogue: combine per-core vector partials, apply dice formula.
    num_sum = jnp.sum(partials[:, 0], dtype=jnp.float32)
    den_sum = jnp.sum(partials[:, 1], dtype=jnp.float32)
    num = 2.0 * num_sum + smooth
    den = den_sum + smooth
    return (1.0 - num / den).astype(jnp.float32)


if __name__ == "__main__":
    key = jax.random.PRNGKey(0)
    kp, kt = jax.random.split(key)
    # predict/target: [N, C, H, W] = [2, 4, 16, 16]
    predict = jax.nn.sigmoid(jax.random.normal(kp, (2, 4, 16, 16), jnp.float32))
    target = (jax.random.uniform(kt, (2, 4, 16, 16)) > 0.5).astype(jnp.float32)

    loss = binary_dice_loss(predict, target)
    jax.block_until_ready(loss)

    # reference check in plain JAX (matches the torch module)
    p2 = predict.reshape(2, -1)
    t2 = target.reshape(2, -1)
    num = jnp.sum(p2 * t2) * 2 + SMOOTH
    den = jnp.sum(p2 ** P_EXP + t2 ** P_EXP) + SMOOTH
    ref = 1.0 - num / den
    assert jnp.allclose(loss, ref, rtol=1e-5, atol=1e-6), (loss, ref)

    print("KERNEL_OK")
</pallas_src>

<mosaic_0001>
module attributes {stable_mosaic.version = 11 : i64} {
  func.func @_dice_partial_kernel(%arg0: i32, %arg1: i32, %arg2: memref<8x512xf32, #tpu.memory_space<vmem>>, %arg3: memref<8x512xf32, #tpu.memory_space<vmem>>, %arg4: memref<1x2x8x512xf32, #tpu.memory_space<vmem>>) attributes {dimension_semantics = [#tpu.dimension_semantics<parallel>, #tpu.dimension_semantics<arbitrary>], iteration_bounds = array<i64: 1, 1>, scalar_prefetch = 0 : i64, scratch_operands = 0 : i64, tpu.core_type = #tpu.core_type<tc>, window_params = [{transform_indices = @transform_0, window_bounds = array<i64: 8, 512>}, {transform_indices = @transform_1, window_bounds = array<i64: 8, 512>}, {transform_indices = @transform_2, window_bounds = array<i64: 1, 2, 8, 512>}]} {
    %c0_i32 = arith.constant 0 : i32
    %0 = arith.cmpi eq, %arg1, %c0_i32 : i32
    %1 = arith.extui %0 : i1 to i32
    %c0_i32_0 = arith.constant 0 : i32
    %2 = arith.cmpi ne, %1, %c0_i32_0 : i32
    scf.if %2 {
      %cst = arith.constant 0.000000e+00 : f32
      %21 = vector.broadcast %cst : f32 to vector<1x2x8x512xf32>
      %c0_19 = arith.constant 0 : index
      %c0_20 = arith.constant 0 : index
      %c0_21 = arith.constant 0 : index
      %c0_22 = arith.constant 0 : index
      %22 = vector.load %arg4[%c0_19, %c0_20, %c0_21, %c0_22] : memref<1x2x8x512xf32, #tpu.memory_space<vmem>>, vector<1x2x8x512xf32>
      tpu.vector_store %arg4[%c0_19, %c0_20, %c0_21, %c0_22], %21 {strides = array<i32>} : memref<1x2x8x512xf32, #tpu.memory_space<vmem>>, vector<1x2x8x512xf32>,
    } else {
    }
    %c0 = arith.constant 0 : index
    %c0_1 = arith.constant 0 : index
    %3 = vector.load %arg2[%c0, %c0_1] : memref<8x512xf32, #tpu.memory_space<vmem>>, vector<8x512xf32>
    %c0_2 = arith.constant 0 : index
    %c0_3 = arith.constant 0 : index
    %4 = vector.load %arg3[%c0_2, %c0_3] : memref<8x512xf32, #tpu.memory_space<vmem>>, vector<8x512xf32>
    %5 = arith.mulf %3, %4 : vector<8x512xf32>
    %6 = arith.mulf %3, %3 : vector<8x512xf32>
    %7 = arith.mulf %4, %4 : vector<8x512xf32>
    %8 = arith.addf %6, %7 : vector<8x512xf32>
    %c0_4 = arith.constant 0 : index
    %c0_5 = arith.constant 0 : index
    %c0_6 = arith.constant 0 : index
    %c0_7 = arith.constant 0 : index
    %9 = vector.load %arg4[%c0_4, %c0_5, %c0_6, %c0_7] : memref<1x2x8x512xf32, #tpu.memory_space<vmem>>, vector<1x1x8x512xf32>
    %10 = vector.shape_cast %9 : vector<1x1x8x512xf32> to vector<8x512xf32>
    %11 = arith.addf %10, %5 : vector<8x512xf32>
    %c0_8 = arith.constant 0 : index
    %c0_9 = arith.constant 0 : index
    %c0_10 = arith.constant 0 : index
    %c0_11 = arith.constant 0 : index
    %12 = vector.load %arg4[%c0_8, %c0_9, %c0_10, %c0_11] : memref<1x2x8x512xf32, #tpu.memory_space<vmem>>, vector<1x1x8x512xf32>
    %13 = vector.shape_cast %12 : vector<1x1x8x512xf32> to vector<8x512xf32>
    %14 = vector.shape_cast %11 : vector<8x512xf32> to vector<1x1x8x512xf32>
    tpu.vector_store %arg4[%c0_8, %c0_9, %c0_10, %c0_11], %14 {strides = array<i32>} : memref<1x2x8x512xf32, #tpu.memory_space<vmem>>, vector<1x1x8x512xf32>,
    %c0_12 = arith.constant 0 : index
    %c1 = arith.constant 1 : index
    %c0_13 = arith.constant 0 : index
    %c0_14 = arith.constant 0 : index
    %15 = vector.load %arg4[%c0_12, %c1, %c0_13, %c0_14] : memref<1x2x8x512xf32, #tpu.memory_space<vmem>>, vector<1x1x8x512xf32>
    %16 = vector.shape_cast %15 : vector<1x1x8x512xf32> to vector<8x512xf32>
    %17 = arith.addf %16, %8 : vector<8x512xf32>
    %c0_15 = arith.constant 0 : index
    %c1_16 = arith.constant 1 : index
    %c0_17 = arith.constant 0 : index
    %c0_18 = arith.constant 0 : index
    %18 = vector.load %arg4[%c0_15, %c1_16, %c0_17, %c0_18] : memref<1x2x8x512xf32, #tpu.memory_space<vmem>>, vector<1x1x8x512xf32>
    %19 = vector.shape_cast %18 : vector<1x1x8x512xf32> to vector<8x512xf32>
    %20 = vector.shape_cast %17 : vector<8x512xf32> to vector<1x1x8x512xf32>
    tpu.vector_store %arg4[%c0_15, %c1_16, %c0_17, %c0_18], %20 {strides = array<i32>} : memref<1x2x8x512xf32, #tpu.memory_space<vmem>>, vector<1x1x8x512xf32>,
    return
  }
  func.func @transform_0(%arg0: i32, %arg1: i32) -> (i32, i32) {
    %c1_i32 = arith.constant 1 : i32
    %0 = arith.muli %arg0, %c1_i32 : i32
    %1 = arith.addi %0, %arg1 : i32
    %c0_i32 = arith.constant 0 : i32
    %c0_i32_0 = arith.constant 0 : i32
    return %1, %c0_i32 : i32, i32
  }
  func.func @transform_1(%arg0: i32, %arg1: i32) -> (i32, i32) {
    %c1_i32 = arith.constant 1 : i32
    %0 = arith.muli %arg0, %c1_i32 : i32
    %1 = arith.addi %0, %arg1 : i32
    %c0_i32 = arith.constant 0 : i32
    %c0_i32_0 = arith.constant 0 : i32
    return %1, %c0_i32 : i32, i32
  }
  func.func @transform_2(%arg0: i32, %arg1: i32) -> (i32, i32, i32, i32) {
    %c0_i32 = arith.constant 0 : i32
    %c0_i32_0 = arith.constant 0 : i32
    %c0_i32_1 = arith.constant 0 : i32
    %c0_i32_2 = arith.constant 0 : i32
    return %arg0, %c0_i32, %c0_i32_0, %c0_i32_1 : i32, i32, i32, i32
  }
}

</mosaic_0001>

<llo_original>
// kernel: tpu_custom_call.1
$region0: #{tpu_custom_call.1}
  #allocation0 [shape = 'u32[]', space=smem, size = 0x4, offset = 0x4, fixed_abs, tag = 'smem constant byte address 0x4 - core index']
  #allocation1 [shape = 'u32[144,128]{1,0:T(1,128)}', space=vmem, size = 0x12000, scoped, tag = 'internal scratch']
  %s0 = inlined_call_operand.hbm [shape: f32[8,512], index: 0, kind: input, shape index: {}]
  %s1 = inlined_call_operand.hbm [shape: f32[8,512], index: 1, kind: input, shape index: {}]
  %s2 = inlined_call_operand.hbm [shape: f32[1,2,8,512], index: 2, kind: output, shape index: {}]
  %s3 = sld [smem:[#allocation0]]
  $region30: #{tpu_custom_call.1} parent=0
    _
  %s5 = ssub.s32 1, %s3
  %s6 = scalar_select 0, %s5, %s3
  $region1: #{tpu_custom_call.1} parent=0
    #allocation2 [shape = 'u8[16384]{0}', space=vmem, size = 0x4000, scoped, tag = 'input window, operand 0, single buffered']
    #allocation3 [shape = 's32[1]{0}', space=sflag, size = 0x4, scoped, tag = 'scoped memory for tpu_custom_call.1']
    #allocation4 [shape = 's32[1]{0}', space=sflag, size = 0x4, scoped, tag = 'scoped memory for tpu_custom_call.1']
    #allocation5 [shape = 'u8[16384]{0}', space=vmem, size = 0x4000, scoped, tag = 'input window, operand 1, single buffered']
    #allocation6 [shape = 's32[1]{0}', space=sflag, size = 0x4, scoped, tag = 'scoped memory for tpu_custom_call.1']
    #allocation7 [shape = 'u8[32768]{0}', space=vmem, size = 0x8000, scoped, tag = 'output window, operand 0, single buffered']
    %7 = vsyncpa [#allocation3], 0
    %8 = vsyncpa [#allocation6], 0
    %9 = vsyncpa [#allocation4], 0
    // Predicated region
    $region2: #{tpu_custom_call.1} parent=1 // pred_check
      _
    $region3: #{tpu_custom_call.1} parent=1 // pred_check_branch
      %11 = sbr.rel (0) target = $region5
    $region4: #{tpu_custom_call.1} parent=1 // pred_region
      %s12 = sadd.s32 0, 0
      %s14 = ssub.s32 512, 512
      %15 = vsyncadd [#allocation3], %s14
      %s16 = smul.addr %s12, 4
      %s17 = smul.addr %s16, 128
      %s18 = scalar_lea.hbm %s0, %s17
      %s20 = sshll.u32 [#allocation2], 4
      %s21 = int_to_ptr.vmem [resolvable:$true] %s20
      %23 = dma.hbm_to_vmem [thread:$0]  %s18, 512, %s21, [#allocation3]
    $region5: #{tpu_custom_call.1} parent=1 // pred_fallthru
      _
    // Predicated region
    $region6: #{tpu_custom_call.1} parent=1 // pred_check
      _
    $region7: #{tpu_custom_call.1} parent=1 // pred_check_branch
      %25 = sbr.rel (0) target = $region9
    $region8: #{tpu_custom_call.1} parent=1 // pred_region
      %s26 = sadd.s32 0, 0
      %s28 = ssub.s32 512, 512
      %29 = vsyncadd [#allocation6], %s28
      %s30 = smul.addr %s26, 4
      %s31 = smul.addr %s30, 128
      %s32 = scalar_lea.hbm %s1, %s31
      %s34 = sshll.u32 [#allocation5], 4
      %s35 = int_to_ptr.vmem [resolvable:$true] %s34
      %37 = dma.hbm_to_vmem [thread:$0]  %s32, 512, %s35, [#allocation6]
    $region9: #{tpu_custom_call.1} parent=1 // pred_fallthru
      _
    // Predicated region
    $region10: #{tpu_custom_call.1} parent=1 // pred_check
      _
    $region11: #{tpu_custom_call.1} parent=1 // pred_check_branch
      %39 = sbr.rel (0) target = $region13
    $region12: #{tpu_custom_call.1} parent=1 // pred_region
      %40 = dma.done [#allocation3], 512
    $region13: #{tpu_custom_call.1} parent=1 // pred_fallthru
      _
    // Predicated region
    $region14: #{tpu_custom_call.1} parent=1 // pred_check
      _
    $region15: #{tpu_custom_call.1} parent=1 // pred_check_branch
      %42 = sbr.rel (0) target = $region17
    $region16: #{tpu_custom_call.1} parent=1 // pred_region
      %43 = dma.done [#allocation6], 512
    $region17: #{tpu_custom_call.1} parent=1 // pred_fallthru
      _
    %s44 = sadd.s32 0, 0
    %s45 = sadd.s32 0, 0
    %p46 = scmp.eq.s32.totalorder 0, 0
    // Predicated region
    $region18: #{tpu_custom_call.1} parent=1 // pred_check
      %p47 = pneg %p46
    $region19: #{tpu_custom_call.1} parent=1 // pred_check_branch
      %49 = sbr.rel (%p47) target = $region21
    $region20: #{tpu_custom_call.1} parent=1 // pred_region
      %50 = vst [vmem:[#allocation7] sm:$0xff] 0.0
      %51 = vst [vmem:[#allocation7 + $0x8] sm:$0xff] 0.0
      %52 = vst [vmem:[#allocation7 + $0x10] sm:$0xff] 0.0
      %53 = vst [vmem:[#allocation7 + $0x18] sm:$0xff] 0.0
      %54 = vst [vmem:[#allocation7 + $0x20] sm:$0xff] 0.0
      %55 = vst [vmem:[#allocation7 + $0x28] sm:$0xff] 0.0
      %56 = vst [vmem:[#allocation7 + $0x30] sm:$0xff] 0.0
      %57 = vst [vmem:[#allocation7 + $0x38] sm:$0xff] 0.0
    $region21: #{tpu_custom_call.1} parent=1 // pred_fallthru
      _
    %v58 = vld [vmem:[#allocation2] sm:$0xff]
    %v59 = vld [vmem:[#allocation2 + $0x8] sm:$0xff]
    %v60 = vld [vmem:[#allocation2 + $0x10] sm:$0xff]
    %v61 = vld [vmem:[#allocation2 + $0x18] sm:$0xff]
    %v62 = vld [vmem:[#allocation5] sm:$0xff]
    %v63 = vld [vmem:[#allocation5 + $0x8] sm:$0xff]
    %v64 = vld [vmem:[#allocation5 + $0x10] sm:$0xff]
    %v65 = vld [vmem:[#allocation5 + $0x18] sm:$0xff]
    %v66 = vmul.f32 %v58, %v62
    %v67 = vmul.f32 %v59, %v63
    %v68 = vmul.f32 %v60, %v64
    %v69 = vmul.f32 %v61, %v65
    %v70 = vmul.f32 %v58, %v58
    %v71 = vmul.f32 %v59, %v59
    %v72 = vmul.f32 %v60, %v60
    %v73 = vmul.f32 %v61, %v61
    %v74 = vmul.f32 %v62, %v62
    %v75 = vmul.f32 %v63, %v63
    %v76 = vmul.f32 %v64, %v64
    %v77 = vmul.f32 %v65, %v65
    %v78 = vadd.f32 %v70, %v74
    %v79 = vadd.f32 %v71, %v75
    %v80 = vadd.f32 %v72, %v76
    %v81 = vadd.f32 %v73, %v77
    %v82 = vld [vmem:[#allocation7] sm:$0xff]
    %v83 = vld [vmem:[#allocation7 + $0x8] sm:$0xff]
    %v84 = vld [vmem:[#allocation7 + $0x10] sm:$0xff]
    %v85 = vld [vmem:[#allocation7 + $0x18] sm:$0xff]
    %v86 = vadd.f32 %v82, %v66
    %v87 = vadd.f32 %v83, %v67
    %v88 = vadd.f32 %v84, %v68
    %v89 = vadd.f32 %v85, %v69
    %90 = vst [vmem:[#allocation7] sm:$0xff] %v86
    %91 = vst [vmem:[#allocation7 + $0x8] sm:$0xff] %v87
    %92 = vst [vmem:[#allocation7 + $0x10] sm:$0xff] %v88
    %93 = vst [vmem:[#allocation7 + $0x18] sm:$0xff] %v89
    %s94 = scalar_lea.vmem [#allocation7], 32
    %v95 = vld [vmem:[%s94] sm:$0xff]
    %v96 = vld [vmem:[%s94 + $0x8] sm:$0xff]
    %v97 = vld [vmem:[%s94 + $0x10] sm:$0xff]
    %v98 = vld [vmem:[%s94 + $0x18] sm:$0xff]
    %v99 = vadd.f32 %v95, %v78
    %v100 = vadd.f32 %v96, %v79
    %v101 = vadd.f32 %v97, %v80
    %v102 = vadd.f32 %v98, %v81
    %103 = vst [vmem:[%s94] sm:$0xff] %v99
    %104 = vst [vmem:[%s94 + $0x8] sm:$0xff] %v100
    %105 = vst [vmem:[%s94 + $0x10] sm:$0xff] %v101
    %106 = vst [vmem:[%s94 + $0x18] sm:$0xff] %v102
    // Predicated region
    $region22: #{tpu_custom_call.1} parent=1 // pred_check
      _
    $region23: #{tpu_custom_call.1} parent=1 // pred_check_branch
      %108 = sbr.rel (0) target = $region25
    $region24: #{tpu_custom_call.1} parent=1 // pred_region
      %s110 = ssub.s32 1024, 1024
      %111 = vsyncadd [#allocation4], %s110
      %s112 = sshll.u32 [#allocation7], 4
      %s113 = int_to_ptr.vmem [resolvable:$true] %s112
      %118 = dma.vmem_to_hbm [thread:$0]  %s113, 1024, %s2, [#allocation4], 512, 512, 32
    $region25: #{tpu_custom_call.1} parent=1 // pred_fallthru
      _
    // Predicated region
    $region26: #{tpu_custom_call.1} parent=1 // pred_check
      _
    $region27: #{tpu_custom_call.1} parent=1 // pred_check_branch
      %120 = sbr.rel (0) target = $region29
    $region28: #{tpu_custom_call.1} parent=1 // pred_region
      %121 = dma.done [#allocation4], 1024
    $region29: #{tpu_custom_call.1} parent=1 // pred_fallthru
      _
    %122 = vsyncpa [#allocation3], 1
    %123 = vsyncpa [#allocation6], 1
    %124 = vsyncpa [#allocation4], 1

</llo_original>
